<compile_context>
chip_gen: v7x
topology: tpu7x:2x2x1
jax: 0.10.0
libtpu: 0.0.40
codegen_flags: <defaults>
</compile_context>

<pallas_src>
import jax
import jax.numpy as jnp
from jax.experimental import pallas as pl
from jax.experimental.pallas import tpu as pltpu

LN_EPS = 1e-6


def grn_kernel(x_ref, gamma_ref, beta_ref, o_ref):
    x = x_ref[...]                                               # (1, c_blk, T) f32

    # Gx = L2 norm over the time axis (last dim / lanes), keepdim.
    gx = jnp.sqrt(jnp.sum(x * x, axis=-1, keepdims=True))        # (1, c_blk, 1)

    # Torch's Gx.mean(dim=-1, keepdim=True) is an identity reduce (last dim of
    # Gx is size 1), so Nx = Gx / (Gx + eps).  Fold the epilogue:
    #   y = gamma*(x*Nx) + beta + x = x*(gamma*Nx + 1) + beta
    nx = gx / (gx + LN_EPS)                                       # (1, c_blk, 1)
    scale = gamma_ref[...] * nx + 1.0                             # (1, c_blk, 1)

    o_ref[...] = (x * scale + beta_ref[...]).astype(o_ref.dtype)  # (1, c_blk, T)


def _choose_c_block(c, t, itemsize):
    """Pick a channel-block size: whole T per block, ~2 MiB target, 8-row aligned."""
    target_rows = max(8, (2 << 20) // max(1, t * itemsize))
    c_blk = min(c, (target_rows // 8) * 8)
    if c_blk <= 0 or c_blk >= c or c % 8 != 0:
        return c          # small or awkward C: keep the whole channel extent
    return c_blk


def grn_forward(x, gamma, beta):
    """x: (B, C, T); gamma, beta: (1, C, 1) in the PyTorch layout."""
    b, c, t = x.shape
    assert gamma.shape == (1, c, 1) and beta.shape == (1, c, 1)

    c_blk = _choose_c_block(c, t, x.dtype.itemsize)
    grid = (b, pl.cdiv(c, c_blk))

    return pl.pallas_call(
        grn_kernel,
        out_shape=jax.ShapeDtypeStruct((b, c, t), x.dtype),
        grid=grid,
        in_specs=[
            # x: one batch row, c_blk channels, full T (reduction axis whole).
            pl.BlockSpec((1, c_blk, t), lambda bi, ci: (bi, ci, 0)),
            # gamma/beta: same channel block as x; invariant in the batch axis
            # so the tiny DMA is not repeated per batch step.
            pl.BlockSpec((1, c_blk, 1), lambda bi, ci: (0, ci, 0)),
            pl.BlockSpec((1, c_blk, 1), lambda bi, ci: (0, ci, 0)),
        ],
        out_specs=pl.BlockSpec((1, c_blk, t), lambda bi, ci: (bi, ci, 0)),
        compiler_params=pltpu.CompilerParams(
            dimension_semantics=("parallel", "parallel"),
        ),
    )(x, gamma, beta)


def grn_reference(x, gamma, beta):
    """Plain-JAX reference mirroring the PyTorch forward verbatim."""
    gx = jnp.sqrt(jnp.sum(x * x, axis=2, keepdims=True))
    nx = gx / (jnp.mean(gx, axis=-1, keepdims=True) + LN_EPS)
    return gamma * (x * nx) + beta + x


if __name__ == "__main__":
    B, C, T = 2, 32, 128

    key = jax.random.PRNGKey(0)
    kx, kg, kb = jax.random.split(key, 3)

    x = jax.random.normal(kx, (B, C, T), dtype=jnp.float32)
    # The module initializes gamma/beta to zeros (identity output); use random
    # values here so the test actually exercises the normalization path.
    gamma = jax.random.normal(kg, (1, C, 1), dtype=jnp.float32) * 0.1
    beta = jax.random.normal(kb, (1, C, 1), dtype=jnp.float32) * 0.1

    out = grn_forward(x, gamma, beta)
    out = jax.block_until_ready(out)

    ref = grn_reference(x, gamma, beta)
    assert out.shape == (B, C, T)
    assert jnp.allclose(out, ref, atol=1e-5, rtol=1e-5), "mismatch vs JAX reference"

    print("KERNEL_OK")
</pallas_src>

<mosaic_0001>
module attributes {stable_mosaic.version = 11 : i64} {
  func.func @grn_kernel(%arg0: i32, %arg1: i32, %arg2: memref<1x32x128xf32, #tpu.memory_space<vmem>>, %arg3: memref<1x32x1xf32, #tpu.memory_space<vmem>>, %arg4: memref<1x32x1xf32, #tpu.memory_space<vmem>>, %arg5: memref<1x32x128xf32, #tpu.memory_space<vmem>>) attributes {dimension_semantics = [#tpu.dimension_semantics<parallel>, #tpu.dimension_semantics<parallel>], iteration_bounds = array<i64: 2, 1>, scalar_prefetch = 0 : i64, scratch_operands = 0 : i64, tpu.core_type = #tpu.core_type<tc>, window_params = [{transform_indices = @transform_0, window_bounds = array<i64: 1, 32, 128>}, {transform_indices = @transform_1, window_bounds = array<i64: 1, 32, 1>}, {transform_indices = @transform_2, window_bounds = array<i64: 1, 32, 1>}, {transform_indices = @transform_3, window_bounds = array<i64: 1, 32, 128>}]} {
    %c0 = arith.constant 0 : index
    %c0_0 = arith.constant 0 : index
    %c0_1 = arith.constant 0 : index
    %0 = vector.load %arg2[%c0, %c0_0, %c0_1] : memref<1x32x128xf32, #tpu.memory_space<vmem>>, vector<1x32x128xf32>
    %1 = arith.mulf %0, %0 : vector<1x32x128xf32>
    %cst = arith.constant dense<0.000000e+00> : vector<1x32xf32>
    %2 = vector.multi_reduction <add>, %1, %cst [2] : vector<1x32x128xf32> to vector<1x32xf32>
    %3 = vector.shape_cast %2 : vector<1x32xf32> to vector<1x32x1xf32>
    %4 = math.sqrt %3 : vector<1x32x1xf32>
    %cst_2 = arith.constant 9.99999997E-7 : f32
    %5 = vector.broadcast %cst_2 : f32 to vector<1x32x1xf32>
    %6 = arith.addf %4, %5 : vector<1x32x1xf32>
    %7 = arith.divf %4, %6 : vector<1x32x1xf32>
    %c0_3 = arith.constant 0 : index
    %c0_4 = arith.constant 0 : index
    %c0_5 = arith.constant 0 : index
    %8 = vector.load %arg3[%c0_3, %c0_4, %c0_5] : memref<1x32x1xf32, #tpu.memory_space<vmem>>, vector<1x32x1xf32>
    %9 = arith.mulf %8, %7 : vector<1x32x1xf32>
    %cst_6 = arith.constant 1.000000e+00 : f32
    %10 = vector.broadcast %cst_6 : f32 to vector<1x32x1xf32>
    %11 = arith.addf %9, %10 : vector<1x32x1xf32>
    %12 = vector.broadcast %11 : vector<1x32x1xf32> to vector<1x32x128xf32>
    %13 = arith.mulf %0, %12 : vector<1x32x128xf32>
    %c0_7 = arith.constant 0 : index
    %c0_8 = arith.constant 0 : index
    %c0_9 = arith.constant 0 : index
    %14 = vector.load %arg4[%c0_7, %c0_8, %c0_9] : memref<1x32x1xf32, #tpu.memory_space<vmem>>, vector<1x32x1xf32>
    %15 = vector.broadcast %14 : vector<1x32x1xf32> to vector<1x32x128xf32>
    %16 = arith.addf %13, %15 : vector<1x32x128xf32>
    %c0_10 = arith.constant 0 : index
    %c0_11 = arith.constant 0 : index
    %c0_12 = arith.constant 0 : index
    %17 = vector.load %arg5[%c0_10, %c0_11, %c0_12] : memref<1x32x128xf32, #tpu.memory_space<vmem>>, vector<1x32x128xf32>
    tpu.vector_store %arg5[%c0_10, %c0_11, %c0_12], %16 {strides = array<i32>} : memref<1x32x128xf32, #tpu.memory_space<vmem>>, vector<1x32x128xf32>,
    return
  }
  func.func @transform_0(%arg0: i32, %arg1: i32) -> (i32, i32, i32) {
    %c0_i32 = arith.constant 0 : i32
    %c0_i32_0 = arith.constant 0 : i32
    return %arg0, %arg1, %c0_i32 : i32, i32, i32
  }
  func.func @transform_1(%arg0: i32, %arg1: i32) -> (i32, i32, i32) {
    %c0_i32 = arith.constant 0 : i32
    %c0_i32_0 = arith.constant 0 : i32
    %c0_i32_1 = arith.constant 0 : i32
    return %c0_i32, %arg1, %c0_i32_0 : i32, i32, i32
  }
  func.func @transform_2(%arg0: i32, %arg1: i32) -> (i32, i32, i32) {
    %c0_i32 = arith.constant 0 : i32
    %c0_i32_0 = arith.constant 0 : i32
    %c0_i32_1 = arith.constant 0 : i32
    return %c0_i32, %arg1, %c0_i32_0 : i32, i32, i32
  }
  func.func @transform_3(%arg0: i32, %arg1: i32) -> (i32, i32, i32) {
    %c0_i32 = arith.constant 0 : i32
    %c0_i32_0 = arith.constant 0 : i32
    return %arg0, %arg1, %c0_i32 : i32, i32, i32
  }
}

</mosaic_0001>

<llo_original>
// kernel: tpu_custom_call.1
$region0: #{tpu_custom_call.1}
  #allocation0 [shape = 'u32[]', space=smem, size = 0x4, offset = 0x4, fixed_abs, tag = 'smem constant byte address 0x4 - core index']
  #allocation1 [shape = 'u32[144,128]{1,0:T(1,128)}', space=vmem, size = 0x12000, scoped, tag = 'internal scratch']
  %s0 = inlined_call_operand.vmem [shape: f32[2,32,128], index: 0, kind: input, shape index: {}]
  %s1 = inlined_call_operand.vmem [shape: f32[1,32,1], index: 1, kind: input, shape index: {}]
  %s2 = inlined_call_operand.vmem [shape: f32[1,32,1], index: 2, kind: input, shape index: {}]
  %s3 = inlined_call_operand.hbm [shape: f32[2,32,128], index: 3, kind: output, shape index: {}]
  %s4 = sld [smem:[#allocation0]]
  $region45: #{tpu_custom_call.1} parent=0
    _
  %s6 = ssub.s32 1, %s4
  %s7 = scalar_select 0, %s6, %s4
  $region1: #{tpu_custom_call.1} parent=0
    #allocation2 [shape = 'u8[32768]{0}', space=vmem, size = 0x8000, scoped, tag = 'output window, operand 0']
    #allocation3 [shape = 's32[2]{0}', space=sflag, size = 0x8, scoped, tag = 'scoped memory for tpu_custom_call.1']
    %8 = vsyncpa [#allocation3], 0
    %s9 = scalar_lea.sflag [#allocation3], 1
    %10 = vsyncpa %s9, 0
    loop: start=0, step=1, limit=4
    $region2: #{tpu_custom_call.1} parent=1 // loop_pre_header
      _
    $region3: #{tpu_custom_call.1} parent=1 // loop_header
      %s12 = sphi 0, %s16
      %p13 = scmp.ge.s32.totalorder %s12, 4
      %s19 = sphi 0, %s31
      %s20 = sphi 0, %s27
      %s21 = sphi 0, %s19
      %s22 = sphi 0, %s20
      %s23 = sphi 0, %s21
      %s24 = sphi 0, %s22
      %s36 = sphi 0, %s38
      %s39 = sphi 0, %s36
      %s40 = sphi 0, %s39
      %s56 = sphi 0, %s40
      %s62 = sphi 0, %s64
      %s65 = sphi 0, %s62
      %s66 = sphi 0, %s65
      %s82 = sphi 0, %s66
      %s88 = sphi 0, %s90
      %s91 = sphi 0, %s88
      %s92 = sphi 0, %s91
      %s108 = sphi 0, %s92
      %s116 = sphi 0, %s118
      %s119 = sphi 0, %s116
      %s120 = sphi 0, %s119
      %s136 = sphi 0, %s120
    $region4: #{tpu_custom_call.1} parent=1 // loop_header_branch
      %15 = sbr.rel (%p13) target = $region8
    $region5: #{tpu_custom_call.1} parent=1 // loop_body
      %s17 = ssub.s32 %s12, 1
      %s18 = ssub.s32 %s12, 2
      %s25 = sadd.s32 1, %s20
      %p26 = scmp.ge.s32.totalorder %s25, 1
      %s27 = scalar_select %p26, 0, %s25
      %s28 = sadd.s32 1, %s19
      %s29 = scalar_select %p26, %s28, %s19
      %p30 = scmp.ge.s32.totalorder %s29, 2
      %s31 = scalar_select %p30, 0, %s29
      %s32 = ssub.s32 %s19, %s31
      %s33 = ssub.s32 %s20, %s27
      %s34 = sor.u32 %s32, %s33
      %p35 = scmp.eq.s32.totalorder %s34, 0
      %s37 = sadd.s32 %s36, 1
      %s38 = scalar_select %p35, %s36, %s37
      %p41 = pneg %p35
      %p42 = scmp.eq.s32.totalorder %s12, 1
      %p43 = por %p41, %p42
      %p44 = scmp.ne.s32.totalorder %s36, %s39
      %p45 = scmp.eq.s32.totalorder %s12, 0
      %p46 = por %p44, %p45
      %p47 = scmp.ne.s32.totalorder %s36, %s39
      %p48 = scmp.eq.s32.totalorder %s17, 1
      %p49 = por %p47, %p48
      %p50 = scmp.ne.s32.totalorder %s39, %s40
      %p51 = scmp.eq.s32.totalorder %s17, 0
      %p52 = por %p50, %p51
      %p53 = scmp.ne.s32.totalorder %s39, %s40
      %p54 = scmp.eq.s32.totalorder %s18, 1
      %p55 = por %p53, %p54
      %p57 = scmp.ne.s32.totalorder %s40, %s56
      %p58 = scmp.eq.s32.totalorder %s18, 0
      %p59 = por %p57, %p58
      %s60 = ssub.s32 %s20, %s27
      %p61 = scmp.eq.s32.totalorder %s60, 0
      %s63 = sadd.s32 %s62, 1
      %s64 = scalar_select %p61, %s62, %s63
      %p67 = pneg %p61
      %p68 = scmp.eq.s32.totalorder %s12, 1
      %p69 = por %p67, %p68
      %p70 = scmp.ne.s32.totalorder %s62, %s65
      %p71 = scmp.eq.s32.totalorder %s12, 0
      %p72 = por %p70, %p71
      %p73 = scmp.ne.s32.totalorder %s62, %s65
      %p74 = scmp.eq.s32.totalorder %s17, 1
      %p75 = por %p73, %p74
      %p76 = scmp.ne.s32.totalorder %s65, %s66
      %p77 = scmp.eq.s32.totalorder %s17, 0
      %p78 = por %p76, %p77
      %p79 = scmp.ne.s32.totalorder %s65, %s66
      %p80 = scmp.eq.s32.totalorder %s18, 1
      %p81 = por %p79, %p80
      %p83 = scmp.ne.s32.totalorder %s66, %s82
      %p84 = scmp.eq.s32.totalorder %s18, 0
      %p85 = por %p83, %p84
      %s86 = ssub.s32 %s20, %s27
      %p87 = scmp.eq.s32.totalorder %s86, 0
      %s89 = sadd.s32 %s88, 1
      %s90 = scalar_select %p87, %s88, %s89
      %p93 = pneg %p87
      %p94 = scmp.eq.s32.totalorder %s12, 1
      %p95 = por %p93, %p94
      %p96 = scmp.ne.s32.totalorder %s88, %s91
      %p97 = scmp.eq.s32.totalorder %s12, 0
      %p98 = por %p96, %p97
      %p99 = scmp.ne.s32.totalorder %s88, %s91
      %p100 = scmp.eq.s32.totalorder %s17, 1
      %p101 = por %p99, %p100
      %p102 = scmp.ne.s32.totalorder %s91, %s92
      %p103 = scmp.eq.s32.totalorder %s17, 0
      %p104 = por %p102, %p103
      %p105 = scmp.ne.s32.totalorder %s91, %s92
      %p106 = scmp.eq.s32.totalorder %s18, 1
      %p107 = por %p105, %p106
      %p109 = scmp.ne.s32.totalorder %s92, %s108
      %p110 = scmp.eq.s32.totalorder %s18, 0
      %p111 = por %p109, %p110
      %s112 = ssub.s32 %s19, %s31
      %s113 = ssub.s32 %s20, %s27
      %s114 = sor.u32 %s112, %s113
      %p115 = scmp.eq.s32.totalorder %s114, 0
      %s117 = sadd.s32 %s116, 1
      %s118 = scalar_select %p115, %s116, %s117
      %p121 = pneg %p115
      %p122 = scmp.eq.s32.totalorder %s12, 1
      %p123 = por %p121, %p122
      %p124 = scmp.ne.s32.totalorder %s116, %s119
      %p125 = scmp.eq.s32.totalorder %s12, 0
      %p126 = por %p124, %p125
      %p127 = scmp.ne.s32.totalorder %s116, %s119
      %p128 = scmp.eq.s32.totalorder %s17, 1
      %p129 = por %p127, %p128
      %p130 = scmp.ne.s32.totalorder %s119, %s120
      %p131 = scmp.eq.s32.totalorder %s17, 0
      %p132 = por %p130, %p131
      %p133 = scmp.ne.s32.totalorder %s119, %s120
      %p134 = scmp.eq.s32.totalorder %s18, 1
      %p135 = por %p133, %p134
      %p137 = scmp.ne.s32.totalorder %s120, %s136
      %p138 = scmp.eq.s32.totalorder %s18, 0
      %p139 = por %p137, %p138
      %p140 = scmp.le.s32.totalorder 1, %s12
      %p141 = scmp.lt.s32.totalorder %s12, 3
      %p142 = pnand %p140, %p141
      %p143 = pneg %p142
      // Predicated region
      $region9: #{tpu_custom_call.1} parent=5 // pred_check
        _
      $region10: #{tpu_custom_call.1} parent=5 // pred_check_branch
        %145 = sbr.rel (%p142) target = $region12
      $region11: #{tpu_custom_call.1} parent=5 // pred_region
        %s146 = ssub.s32 %s12, 1
        // Predicated region
        $region13: #{tpu_custom_call.1} parent=11 // pred_check
          %p147 = pneg %p78
        $region14: #{tpu_custom_call.1} parent=11 // pred_check_branch
          %149 = sbr.rel (%p147) target = $region16
        $region15: #{tpu_custom_call.1} parent=11 // pred_region
          %s150 = smul.u32 4, %s22
          %p151 = scmp.lt.s32.totalorder %s150, 3
          %s152 = scalar_select %p151, %s150, 3
          %s153 = smul.addr %s152, 8
          %s154 = scalar_lea.vmem %s1, %s153
          %s155 = smul.u32 4, %s22
        $region16: #{tpu_custom_call.1} parent=11 // pred_fallthru
          _
        // Predicated region
        $region17: #{tpu_custom_call.1} parent=11 // pred_check
          %p156 = pneg %p104
        $region18: #{tpu_custom_call.1} parent=11 // pred_check_branch
          %158 = sbr.rel (%p156) target = $region20
        $region19: #{tpu_custom_call.1} parent=11 // pred_region
          %s159 = smul.u32 4, %s22
          %p160 = scmp.lt.s32.totalorder %s159, 3
          %s161 = scalar_select %p160, %s159, 3
          %s162 = smul.addr %s161, 8
          %s163 = scalar_lea.vmem %s2, %s162
          %s164 = smul.u32 4, %s22
        $region20: #{tpu_custom_call.1} parent=11 // pred_fallthru
          _
      $region12: #{tpu_custom_call.1} parent=5 // pred_fallthru
        _
      %p165 = scmp.lt.s32.totalorder %s12, 2
      // Predicated region
      $region21: #{tpu_custom_call.1} parent=5 // pred_check
        %p166 = pneg %p165
      $region22: #{tpu_custom_call.1} parent=5 // pred_check_branch
        %168 = sbr.rel (%p166) target = $region24
      $region23: #{tpu_custom_call.1} parent=5 // pred_region
        // Predicated region
        $region25: #{tpu_custom_call.1} parent=23 // pred_check
          %p169 = pneg %p46
        $region26: #{tpu_custom_call.1} parent=23 // pred_check_branch
          %171 = sbr.rel (%p169) target = $region28
        $region27: #{tpu_custom_call.1} parent=23 // pred_region
          %s172 = smul.u32 4, %s20
          %p173 = scmp.lt.s32.totalorder %s19, 1
          %s174 = scalar_select %p173, %s19, 1
          %p175 = scmp.lt.s32.totalorder %s172, 3
          %s176 = scalar_select %p175, %s172, 3
          %s177 = smul.addr %s174, 4
          %s178 = sadd.s32 %s176, %s177
          %s179 = smul.addr %s178, 8
          %s180 = scalar_lea.vmem %s0, %s179
          %s181 = smul.u32 4, %s20
        $region28: #{tpu_custom_call.1} parent=23 // pred_fallthru
          _
      $region24: #{tpu_custom_call.1} parent=5 // pred_fallthru
        _
      %p182 = scmp.le.s32.totalorder 1, %s12
      %p183 = scmp.lt.s32.totalorder %s12, 3
      %p184 = pnand %p182, %p183
      %p185 = pneg %p184
      // Predicated region
      $region29: #{tpu_custom_call.1} parent=5 // pred_check
        _
      $region30: #{tpu_custom_call.1} parent=5 // pred_check_branch
        %187 = sbr.rel (%p184) target = $region32
      $region31: #{tpu_custom_call.1} parent=5 // pred_region
        %s188 = ssub.s32 %s12, 1
        %s189 = smul.u32 4, %s22
        %p190 = scmp.lt.s32.totalorder %s21, 1
        %s191 = scalar_select %p190, %s21, 1
        %p192 = scmp.lt.s32.totalorder %s189, 3
        %s193 = scalar_select %p192, %s189, 3
        %s194 = smul.addr %s191, 4
        %s195 = sadd.s32 %s193, %s194
        %s196 = smul.addr %s195, 8
        %s197 = scalar_lea.vmem %s0, %s196
        %p198 = pneg %p52
        %p199 = pneg %p49
        %s200 = smul.u32 4, %s22
        %p201 = scmp.lt.s32.totalorder %s200, 3
        %s202 = scalar_select %p201, %s200, 3
        %s203 = smul.addr %s202, 8
        %s204 = scalar_lea.vmem %s1, %s203
        %p205 = pneg %p78
        %p206 = pneg %p75
        %s207 = smul.u32 4, %s22
        %p208 = scmp.lt.s32.totalorder %s207, 3
        %s209 = scalar_select %p208, %s207, 3
        %s210 = smul.addr %s209, 8
        %s211 = scalar_lea.vmem %s2, %s210
        %p212 = pneg %p104
        %p213 = pneg %p101
        %p214 = pneg %p132
        %p215 = pneg %p129
        %s216 = sand.u32 %s119, 1
        %s217 = scalar_lea.sflag [#allocation3], %s216
        %s218 = sand.u32 %s119, 1
        %s219 = smul.addr %s218, 32
        %s220 = scalar_lea.vmem [#allocation2], %s219
        %s221 = smul.u32 4, %s22
        %p222 = scmp.lt.s32.totalorder %s21, 1
        %s223 = scalar_select %p222, %s21, 1
        %p224 = scmp.lt.s32.totalorder %s221, 3
        %s225 = scalar_select %p224, %s221, 3
        %s226 = smul.addr %s223, 4
        %s227 = sadd.s32 %s225, %s226
        %s228 = smul.addr %s227, 8
        %s229 = scalar_lea.vmem %s0, %s228
        %s230 = smul.u32 4, %s22
        %s231 = smul.u32 4, %s22
        %p232 = scmp.lt.s32.totalorder %s231, 3
        %s233 = scalar_select %p232, %s231, 3
        %s234 = smul.addr %s233, 8
        %s235 = scalar_lea.vmem %s1, %s234
        %s236 = smul.u32 4, %s22
        %s237 = smul.u32 4, %s22
        %p238 = scmp.lt.s32.totalorder %s237, 3
        %s239 = scalar_select %p238, %s237, 3
        %s240 = smul.addr %s239, 8
        %s241 = scalar_lea.vmem %s2, %s240
        %s242 = smul.u32 4, %s22
        %s243 = smul.u32 4, %s22
        %v244 = vld [vmem:[%s229] sm:$0xff]
        %v245 = vld [vmem:[%s229 + $0x8] sm:$0xff]
        %v246 = vld [vmem:[%s229 + $0x10] sm:$0xff]
        %v247 = vld [vmem:[%s229 + $0x18] sm:$0xff]
        %v248 = vmul.f32 %v244, %v244
        %v249 = vmul.f32 %v245, %v245
        %v250 = vmul.f32 %v246, %v246
        %v251 = vmul.f32 %v247, %v247
        %252 = vadd.xlane.f32.xlu0 %v248
        %v253 = vpop.xlane.xlu0 %252
        %254 = vadd.xlane.f32.xlu0 %v249
        %v255 = vpop.xlane.xlu0 %254
        %256 = vadd.xlane.f32.xlu0 %v250
        %v257 = vpop.xlane.xlu0 %256
        %258 = vadd.xlane.f32.xlu0 %v251
        %v259 = vpop.xlane.xlu0 %258
        %v260 = vrsqrt.pop %v253
        %v261 = vmul.f32 %v253, %v260
        %vm262 = vcmp.eq.f32.partialorder %v253, inf
        %v263 = vsel %vm262, %v253, %v261
        %vm264 = vcmp.eq.f32.partialorder %v253, 0.0
        %v265 = vand.u32 %v253, 2147483648
        %v266 = vsel %vm264, %v265, %v263
        %v267 = vrsqrt.pop %v255
        %v268 = vmul.f32 %v255, %v267
        %vm269 = vcmp.eq.f32.partialorder %v255, inf
        %v270 = vsel %vm269, %v255, %v268
        %vm271 = vcmp.eq.f32.partialorder %v255, 0.0
        %v272 = vand.u32 %v255, 2147483648
        %v273 = vsel %vm271, %v272, %v270
        %v274 = vrsqrt.pop %v257
        %v275 = vmul.f32 %v257, %v274
        %vm276 = vcmp.eq.f32.partialorder %v257, inf
        %v277 = vsel %vm276, %v257, %v275
        %vm278 = vcmp.eq.f32.partialorder %v257, 0.0
        %v279 = vand.u32 %v257, 2147483648
        %v280 = vsel %vm278, %v279, %v277
        %v281 = vrsqrt.pop %v259
        %v282 = vmul.f32 %v259, %v281
        %vm283 = vcmp.eq.f32.partialorder %v259, inf
        %v284 = vsel %vm283, %v259, %v282
        %vm285 = vcmp.eq.f32.partialorder %v259, 0.0
        %v286 = vand.u32 %v259, 2147483648
        %v287 = vsel %vm285, %v286, %v284
        %v288 = vadd.f32 %v266, 1e-06
        %v289 = vadd.f32 %v273, 1e-06
        %v290 = vadd.f32 %v280, 1e-06
        %v291 = vadd.f32 %v287, 1e-06
        %v292 = vrcp.pop %v288
        %v293 = vmul.f32 %v266, %v292
        %v294 = vrcp.pop %v289
        %v295 = vmul.f32 %v273, %v294
        %v296 = vrcp.pop %v290
        %v297 = vmul.f32 %v280, %v296
        %v298 = vrcp.pop %v291
        %v299 = vmul.f32 %v287, %v298
        %v300 = vld [vmem:[%s235] sm:$0xff]
        %v301 = vld [vmem:[%s235 + $0x8] sm:$0xff]
        %v302 = vld [vmem:[%s235 + $0x10] sm:$0xff]
        %v303 = vld [vmem:[%s235 + $0x18] sm:$0xff]
        %v304 = vmul.f32 %v300, %v293
        %v305 = vmul.f32 %v301, %v295
        %v306 = vmul.f32 %v302, %v297
        %v307 = vmul.f32 %v303, %v299
        %v308 = vadd.f32 %v304, 1.0
        %v309 = vadd.f32 %v305, 1.0
        %v310 = vadd.f32 %v306, 1.0
        %v311 = vadd.f32 %v307, 1.0
        %313 = vset.pattern.permute.xlu0 0
        %314 = vperm.xlu0 %313, %v308
        %v315 = vpop.permute.xlu0 %314
        %318 = vset.pattern.permute.xlu0 0
        %319 = vperm.xlu0 %318, %v309
        %v320 = vpop.permute.xlu0 %319
        %323 = vset.pattern.permute.xlu0 0
        %324 = vperm.xlu0 %323, %v310
        %v325 = vpop.permute.xlu0 %324
        %328 = vset.pattern.permute.xlu0 0
        %329 = vperm.xlu0 %328, %v311
        %v330 = vpop.permute.xlu0 %329
        %v332 = vmul.f32 %v244, %v315
        %v333 = vmul.f32 %v245, %v320
        %v334 = vmul.f32 %v246, %v325
        %v335 = vmul.f32 %v247, %v330
        %v336 = vld [vmem:[%s241] sm:$0xff]
        %v337 = vld [vmem:[%s241 + $0x8] sm:$0xff]
        %v338 = vld [vmem:[%s241 + $0x10] sm:$0xff]
        %v339 = vld [vmem:[%s241 + $0x18] sm:$0xff]
        %341 = vset.pattern.permute.xlu0 0
        %342 = vperm.xlu0 %341, %v336
        %v343 = vpop.permute.xlu0 %342
        %346 = vset.pattern.permute.xlu0 0
        %347 = vperm.xlu0 %346, %v337
        %v348 = vpop.permute.xlu0 %347
        %351 = vset.pattern.permute.xlu0 0
        %352 = vperm.xlu0 %351, %v338
        %v353 = vpop.permute.xlu0 %352
        %356 = vset.pattern.permute.xlu0 0
        %357 = vperm.xlu0 %356, %v339
        %v358 = vpop.permute.xlu0 %357
        %v360 = vadd.f32 %v332, %v343
        %v361 = vadd.f32 %v333, %v348
        %v362 = vadd.f32 %v334, %v353
        %v363 = vadd.f32 %v335, %v358
        %364 = vst [vmem:[%s220] sm:$0xff] %v360
        %365 = vst [vmem:[%s220 + $0x8] sm:$0xff] %v361
        %366 = vst [vmem:[%s220 + $0x10] sm:$0xff] %v362
        %367 = vst [vmem:[%s220 + $0x18] sm:$0xff] %v363
        %s368 = sand.u32 %s119, 1
        %s369 = scalar_lea.sflag [#allocation3], %s368
        %s370 = sand.u32 %s119, 1
        %s371 = smul.addr %s370, 32
        %s372 = scalar_lea.vmem [#allocation2], %s371
        // Predicated region
        $region33: #{tpu_custom_call.1} parent=31 // pred_check
          %p373 = pneg %p129
        $region34: #{tpu_custom_call.1} parent=31 // pred_check_branch
          %375 = sbr.rel (%p373) target = $region36
        $region35: #{tpu_custom_call.1} parent=31 // pred_region
          %s376 = smul.u32 4, %s22
          %s378 = ssub.s32 512, 512
          %379 = vsyncadd %s369, %s378
          %s380 = smul.addr %s21, 4
          %s381 = sadd.s32 %s376, %s380
          %s382 = smul.addr %s381, 128
          %s383 = scalar_lea.hbm %s3, %s382
          %s384 = sshll.u32 %s372, 4
          %s385 = int_to_ptr.vmem [resolvable:$true] %s384
          %390 = dma.vmem_to_hbm [thread:$0]  %s385, 512, %s383, %s369, 128, 128, 8
        $region36: #{tpu_custom_call.1} parent=31 // pred_fallthru
          _
      $region32: #{tpu_custom_call.1} parent=5 // pred_fallthru
        _
      %p391 = scmp.le.s32.totalorder 2, %s12
      // Predicated region
      $region37: #{tpu_custom_call.1} parent=5 // pred_check
        %p392 = pneg %p391
      $region38: #{tpu_custom_call.1} parent=5 // pred_check_branch
        %394 = sbr.rel (%p392) target = $region40
      $region39: #{tpu_custom_call.1} parent=5 // pred_region
        %s395 = ssub.s32 %s12, 2
        // Predicated region
        $region41: #{tpu_custom_call.1} parent=39 // pred_check
          %p396 = pneg %p135
        $region42: #{tpu_custom_call.1} parent=39 // pred_check_branch
          %398 = sbr.rel (%p396) target = $region44
        $region43: #{tpu_custom_call.1} parent=39 // pred_region
          %s399 = sand.u32 %s120, 1
          %s400 = scalar_lea.sflag [#allocation3], %s399
          %s401 = sand.u32 %s120, 1
          %s402 = smul.addr %s401, 32
          %s403 = scalar_lea.vmem [#allocation2], %s402
          %404 = dma.done %s400, 512
        $region44: #{tpu_custom_call.1} parent=39 // pred_fallthru
          _
      $region40: #{tpu_custom_call.1} parent=5 // pred_fallthru
        _
    $region6: #{tpu_custom_call.1} parent=1 // loop_footer
      %s16 = sadd.s32 1, %s12
    $region7: #{tpu_custom_call.1} parent=1 // loop_footer_branch
      %11 = sbr.rel target = $region3
    $region8: #{tpu_custom_call.1} parent=1 // loop_exit
      _
    %405 = vsyncpa [#allocation3], 1
    %s406 = scalar_lea.sflag [#allocation3], 1
    %407 = vsyncpa %s406, 1

</llo_original>
